<compile_context>
chip_gen: v7x
topology: tpu7x:2x2x1
jax: 0.10.0
libtpu: 0.0.40
codegen_flags: <defaults>
</compile_context>

<pallas_src>
import functools

import jax
import jax.numpy as jnp
from jax.experimental import pallas as pl
from jax.experimental.pallas import tpu as pltpu

EPS = 1e-08

_MAX_LANE_CHUNKS = 64  # bound on unrolled per-step VPU adds in the stats kernel


def _physical_vmem_bytes() -> int:
    """Best-effort per-core VMEM capacity; conservative fallback = v7x (64 MiB)."""
    phys = 64 << 20
    try:
        info = pltpu.get_tpu_info()
        for attr in ("vmem_capacity_bytes", "vmem_bytes", "vmem_size_bytes"):
            v = getattr(info, attr, None)
            if isinstance(v, int) and v > 0:
                phys = v
                break
    except Exception:
        pass
    return phys


# ----------------------------------------------------------------------------
# Kernel 1: whole row resident (grid only over batch tiles).
# ----------------------------------------------------------------------------
def _snr_full_row_kernel(est_ref, orig_ref, out_ref):
    est = est_ref[...]
    orig = orig_ref[...]
    if est.dtype != jnp.float32:
        est = est.astype(jnp.float32)
    if orig.dtype != jnp.float32:
        orig = orig.astype(jnp.float32)

    target = jnp.mean(jnp.square(orig), axis=-1, keepdims=True)
    noise = jnp.mean(jnp.square(est - target), axis=-1, keepdims=True) + EPS
    out_ref[...] = (10.0 * jnp.log10(target / noise)).astype(out_ref.dtype)


# ----------------------------------------------------------------------------
# Kernel 2: T tiled with sufficient statistics (grid = (batch tiles, T tiles)).
# ----------------------------------------------------------------------------
def _snr_stats_kernel(est_ref, orig_ref, out_ref, s_oo, s_e, s_ee, *,
                      tt, t_valid, inv_t, ragged, chunked):
    k = pl.program_id(1)

    @pl.when(k == 0)
    def _():
        s_oo[...] = jnp.zeros_like(s_oo)
        s_e[...] = jnp.zeros_like(s_e)
        s_ee[...] = jnp.zeros_like(s_ee)

    est = est_ref[...]
    orig = orig_ref[...]
    if est.dtype != jnp.float32:
        est = est.astype(jnp.float32)
    if orig.dtype != jnp.float32:
        orig = orig.astype(jnp.float32)

    if ragged:
        # Last T tile extends past the row end: zero the padded columns.
        # Cheap VPU select; all-true on non-final tiles.
        col = k * tt + jax.lax.broadcasted_iota(jnp.int32, est.shape, 1)
        valid = col < t_valid
        est = jnp.where(valid, est, 0.0)
        orig = jnp.where(valid, orig, 0.0)

    if chunked:
        # (tb, tt) -> (tb, 128) using only full-vreg VPU adds; the single
        # cross-lane (XLU) reduce happens once, in the epilogue.
        def rowsum(x):
            acc = x[:, 0:128]
            for c in range(1, tt // 128):
                acc = acc + x[:, c * 128:(c + 1) * 128]
            return acc
    else:
        def rowsum(x):
            return jnp.sum(x, axis=-1, keepdims=True)

    s_oo[...] += rowsum(orig * orig)
    s_e[...] += rowsum(est)
    s_ee[...] += rowsum(est * est)

    @pl.when(k == pl.num_programs(1) - 1)
    def _():
        sum_oo = jnp.sum(s_oo[...], axis=-1, keepdims=True)
        sum_e = jnp.sum(s_e[...], axis=-1, keepdims=True)
        sum_ee = jnp.sum(s_ee[...], axis=-1, keepdims=True)
        target = sum_oo * inv_t
        # mean((est - target)^2) = mean(est^2) - 2*target*mean(est) + target^2
        noise = sum_ee * inv_t - 2.0 * target * (sum_e * inv_t) + target * target
        noise = jnp.maximum(noise, 0.0) + EPS
        out_ref[...] = (10.0 * jnp.log10(target / noise)).astype(out_ref.dtype)


# ----------------------------------------------------------------------------
# Wrapper: tile selection + dispatch.
# ----------------------------------------------------------------------------
def snr(
    estimated: jax.Array,
    original: jax.Array,
    *,
    tb: int | None = None,
    tt: int | None = None,
    input_budget_bytes: int | None = None,
) -> jax.Array:
    """Compute SNR over the last axis. Inputs: (B, T). Output: (B, 1) float32."""
    assert estimated.shape == original.shape
    assert estimated.dtype == original.dtype
    B, T = estimated.shape
    assert B % 8 == 0, "batch must be a multiple of 8 (sublane tiling)"

    itemsize = jnp.dtype(estimated.dtype).itemsize
    # Sub-32-bit dtypes pack 2/4 rows per sublane: align the batch tile to the
    # packing so packed vregs are fully used (8 for f32, 16 for bf16, 32 for i8/fp8).
    row_align = 8 * max(1, 4 // max(1, itemsize))

    phys_vmem = _physical_vmem_bytes()
    if input_budget_bytes is None:
        # Larger blocks amortize per-step pipeline overhead on this pure
        # HBM-streaming kernel; 64 MiB is safe on 128-MiB parts (v5e/v6e),
        # keep 32 MiB on v7x (64 MiB / TensorCore).
        input_budget_bytes = (64 << 20) if phys_vmem >= (128 << 20) else (32 << 20)
    input_budget_bytes = max(4 << 20, int(input_budget_bytes))

    # VMEM bytes per block element: 2 inputs x 2 pipeline buffers at the input
    # dtype, plus ~2 f32-sized working copies (upcast / elementwise temps).
    bytes_per_elem = 2 * 2 * itemsize + 2 * 4
    elem_budget = max(8 * 128, input_budget_bytes // bytes_per_elem)

    # Batch-tile candidates: divisors of B aligned to the sublane packing
    # (fall back to multiples of 8 if the packing does not divide B).
    cands = [t for t in range(row_align, B + 1, row_align) if B % t == 0]
    if not cands:
        cands = [t for t in range(8, B + 1, 8) if B % t == 0]
    min_tb = cands[0]

    # --- choose the T tile -----------------------------------------------------
    if tt is None:
        if T * min_tb <= elem_budget:
            tt = T  # whole row fits -> full-row kernel
        else:
            cap = max(128, (elem_budget // min_tb) // 128 * 128)
            # Prefer an exact divisor of T (no masked tail) when a large one
            # exists; otherwise keep full-size tiles and mask the ragged tail.
            best_div, d = 0, 128
            while d <= cap:
                if T % d == 0:
                    best_div = d
                d += 128
            tt = best_div if best_div >= cap // 2 else cap
    tt = min(int(tt), T)
    if tt < T:
        assert tt % 128 == 0, "T tile must be a multiple of 128 (lane tiling)"

    grid_t = pl.cdiv(T, tt)
    ragged = (T % tt) != 0

    # --- choose the batch tile ---------------------------------------------------
    if tb is None:
        cap_b = max(min_tb, elem_budget // tt)
        fitting = [t for t in cands if t <= cap_b] or [min_tb]
        tb = fitting[-1]
        # Guarantee >= 2 steps on the (only) parallel grid axis so both v7x
        # TensorCores get work (the "arbitrary" reduction axis can't be sharded).
        if B // tb < 2:
            two_step = [t for t in fitting if B // t >= 2]
            if two_step:
                tb = two_step[-1]
    tb = int(tb)
    assert B % tb == 0, "batch must be divisible by the batch tile"
    grid_b = B // tb

    # --- VMEM limit: honest block accounting, capped at physical VMEM ----------
    block_bytes = bytes_per_elem * tb * tt
    vmem_limit_bytes = int(max(16 << 20,
                               min(phys_vmem - (4 << 20),
                                   max(32 << 20, block_bytes + (8 << 20)))))

    out_shape = jax.ShapeDtypeStruct((B, 1), jnp.float32)

    if grid_t == 1:
        return pl.pallas_call(
            _snr_full_row_kernel,
            out_shape=out_shape,
            grid_spec=pltpu.PrefetchScalarGridSpec(
                num_scalar_prefetch=0,
                grid=(grid_b,),
                in_specs=[
                    pl.BlockSpec((tb, T), lambda i: (i, 0)),
                    pl.BlockSpec((tb, T), lambda i: (i, 0)),
                ],
                out_specs=pl.BlockSpec((tb, 1), lambda i: (i, 0)),
            ),
            compiler_params=pltpu.CompilerParams(
                dimension_semantics=("parallel",),
                vmem_limit_bytes=vmem_limit_bytes,
            ),
        )(estimated, original)

    chunked = (tt // 128) <= _MAX_LANE_CHUNKS
    acc_w = 128 if chunked else 1
    kernel = functools.partial(
        _snr_stats_kernel,
        tt=tt, t_valid=T, inv_t=1.0 / float(T), ragged=ragged, chunked=chunked,
    )
    return pl.pallas_call(
        kernel,
        out_shape=out_shape,
        grid_spec=pltpu.PrefetchScalarGridSpec(
            num_scalar_prefetch=0,
            grid=(grid_b, grid_t),
            in_specs=[
                pl.BlockSpec((tb, tt), lambda i, k: (i, k)),
                pl.BlockSpec((tb, tt), lambda i, k: (i, k)),
            ],
            out_specs=pl.BlockSpec((tb, 1), lambda i, k: (i, 0)),
            scratch_shapes=[pltpu.VMEM((tb, acc_w), jnp.float32)] * 3,
        ),
        compiler_params=pltpu.CompilerParams(
            dimension_semantics=("parallel", "arbitrary"),
            vmem_limit_bytes=vmem_limit_bytes,
        ),
    )(estimated, original)


# ----------------------------------------------------------------------------
# Pure-JAX reference mirroring the PyTorch module.
# ----------------------------------------------------------------------------
def snr_ref(estimated: jax.Array, original: jax.Array) -> jax.Array:
    target = jnp.mean(jnp.square(original), axis=-1, keepdims=True)
    noise = jnp.mean(jnp.square(estimated - target), axis=-1, keepdims=True) + EPS
    return 10.0 * jnp.log10(target / noise)


if __name__ == "__main__":
    key = jax.random.PRNGKey(0)
    k1, k2, k3, k4, k5, k6, k7, k8 = jax.random.split(key, 8)

    # Case 1: small f32 shape, full-row path (auto tile selection).
    B, T = 8, 128
    estimated = jax.random.normal(k1, (B, T), dtype=jnp.float32)
    original = jax.random.normal(k2, (B, T), dtype=jnp.float32)
    out = jax.block_until_ready(snr(estimated, original))
    ref = snr_ref(estimated, original)
    assert out.shape == (B, 1)
    assert jnp.allclose(out, ref, rtol=1e-5, atol=1e-5), (out, ref)

    # Case 2: T-tiled sufficient-statistics path (forced tiles, no ragged tail).
    B2, T2 = 16, 256
    est2 = jax.random.normal(k3, (B2, T2), dtype=jnp.float32)
    orig2 = jax.random.normal(k4, (B2, T2), dtype=jnp.float32)
    out2 = jax.block_until_ready(snr(est2, orig2, tb=8, tt=128))
    ref2 = snr_ref(est2, orig2)
    assert out2.shape == (B2, 1)
    assert jnp.allclose(out2, ref2, rtol=1e-4, atol=1e-4), (out2, ref2)

    # Case 3: T-tiled path with a ragged (masked) last T tile, auto batch tile
    # (also exercises the ">= 2 parallel steps" preference: grid_b == 2).
    B3, T3 = 16, 384
    est3 = jax.random.normal(k5, (B3, T3), dtype=jnp.float32)
    orig3 = jax.random.normal(k6, (B3, T3), dtype=jnp.float32)
    out3 = jax.block_until_ready(snr(est3, orig3, tt=256))
    ref3 = snr_ref(est3, orig3)
    assert out3.shape == (B3, 1)
    assert jnp.allclose(out3, ref3, rtol=1e-4, atol=1e-4), (out3, ref3)

    # Case 4: bf16 inputs (dtype-aware batch-tile alignment + f32 upcast path).
    B4, T4 = 16, 192
    est4 = jax.random.normal(k7, (B4, T4), dtype=jnp.float32).astype(jnp.bfloat16)
    orig4 = jax.random.normal(k8, (B4, T4), dtype=jnp.float32).astype(jnp.bfloat16)
    out4 = jax.block_until_ready(snr(est4, orig4))
    ref4 = snr_ref(est4.astype(jnp.float32), orig4.astype(jnp.float32))
    assert out4.shape == (B4, 1)
    assert jnp.allclose(out4, ref4, rtol=1e-3, atol=1e-3), (out4, ref4)

    print("KERNEL_OK")
</pallas_src>

<mosaic_0001>
module attributes {stable_mosaic.version = 11 : i64} {
  func.func @_snr_full_row_kernel(%arg0: i32, %arg1: memref<8x128xf32, #tpu.memory_space<vmem>>, %arg2: memref<8x128xf32, #tpu.memory_space<vmem>>, %arg3: memref<8x1xf32, #tpu.memory_space<vmem>>) attributes {dimension_semantics = [#tpu.dimension_semantics<parallel>], iteration_bounds = array<i64: 1>, scalar_prefetch = 0 : i64, scratch_operands = 0 : i64, tpu.core_type = #tpu.core_type<tc>, window_params = [{transform_indices = @transform_0, window_bounds = array<i64: 8, 128>}, {transform_indices = @transform_1, window_bounds = array<i64: 8, 128>}, {transform_indices = @transform_2, window_bounds = array<i64: 8, 1>}]} {
    %c0 = arith.constant 0 : index
    %c0_0 = arith.constant 0 : index
    %0 = vector.load %arg1[%c0, %c0_0] : memref<8x128xf32, #tpu.memory_space<vmem>>, vector<8x128xf32>
    %c0_1 = arith.constant 0 : index
    %c0_2 = arith.constant 0 : index
    %1 = vector.load %arg2[%c0_1, %c0_2] : memref<8x128xf32, #tpu.memory_space<vmem>>, vector<8x128xf32>
    %2 = arith.mulf %1, %1 : vector<8x128xf32>
    %cst = arith.constant dense<0.000000e+00> : vector<8xf32>
    %3 = vector.multi_reduction <add>, %2, %cst [1] : vector<8x128xf32> to vector<8xf32>
    %4 = vector.shape_cast %3 : vector<8xf32> to vector<8x1xf32>
    %cst_3 = arith.constant 1.280000e+02 : f32
    %5 = vector.broadcast %cst_3 : f32 to vector<8x1xf32>
    %6 = arith.divf %4, %5 : vector<8x1xf32>
    %7 = vector.broadcast %6 : vector<8x1xf32> to vector<8x128xf32>
    %8 = arith.subf %0, %7 : vector<8x128xf32>
    %9 = arith.mulf %8, %8 : vector<8x128xf32>
    %cst_4 = arith.constant dense<0.000000e+00> : vector<8xf32>
    %10 = vector.multi_reduction <add>, %9, %cst_4 [1] : vector<8x128xf32> to vector<8xf32>
    %11 = vector.shape_cast %10 : vector<8xf32> to vector<8x1xf32>
    %cst_5 = arith.constant 1.280000e+02 : f32
    %12 = vector.broadcast %cst_5 : f32 to vector<8x1xf32>
    %13 = arith.divf %11, %12 : vector<8x1xf32>
    %cst_6 = arith.constant 9.99999993E-9 : f32
    %14 = vector.broadcast %cst_6 : f32 to vector<8x1xf32>
    %15 = arith.addf %13, %14 : vector<8x1xf32>
    %16 = arith.divf %6, %15 : vector<8x1xf32>
    %17 = math.log %16 : vector<8x1xf32>
    %cst_7 = arith.constant 0.434294492 : f32
    %18 = vector.broadcast %cst_7 : f32 to vector<8x1xf32>
    %19 = arith.mulf %17, %18 : vector<8x1xf32>
    %cst_8 = arith.constant 1.000000e+01 : f32
    %20 = vector.broadcast %cst_8 : f32 to vector<8x1xf32>
    %21 = arith.mulf %20, %19 : vector<8x1xf32>
    %c0_9 = arith.constant 0 : index
    %c0_10 = arith.constant 0 : index
    %22 = vector.load %arg3[%c0_9, %c0_10] : memref<8x1xf32, #tpu.memory_space<vmem>>, vector<8x1xf32>
    tpu.vector_store %arg3[%c0_9, %c0_10], %21 {strides = array<i32>} : memref<8x1xf32, #tpu.memory_space<vmem>>, vector<8x1xf32>,
    return
  }
  func.func @transform_0(%arg0: i32) -> (i32, i32) {
    %c0_i32 = arith.constant 0 : i32
    %c0_i32_0 = arith.constant 0 : i32
    return %arg0, %c0_i32 : i32, i32
  }
  func.func @transform_1(%arg0: i32) -> (i32, i32) {
    %c0_i32 = arith.constant 0 : i32
    %c0_i32_0 = arith.constant 0 : i32
    return %arg0, %c0_i32 : i32, i32
  }
  func.func @transform_2(%arg0: i32) -> (i32, i32) {
    %c0_i32 = arith.constant 0 : i32
    %c0_i32_0 = arith.constant 0 : i32
    return %arg0, %c0_i32 : i32, i32
  }
}

</mosaic_0001>

<llo_original>
// kernel: tpu_custom_call.1
$region0: #{tpu_custom_call.1}
  #allocation0 [shape = 'u32[]', space=smem, size = 0x4, offset = 0x4, fixed_abs, tag = 'smem constant byte address 0x4 - core index']
  #allocation1 [shape = 'u32[144,128]{1,0:T(1,128)}', space=vmem, size = 0x12000, scoped, tag = 'internal scratch']
  %s0 = inlined_call_operand.hbm [shape: f32[8,128], index: 0, kind: input, shape index: {}]
  %s1 = inlined_call_operand.hbm [shape: f32[8,128], index: 1, kind: input, shape index: {}]
  %s2 = inlined_call_operand.vmem [shape: f32[8,1], index: 2, kind: output, shape index: {}]
  %s3 = sld [smem:[#allocation0]]
  $region26: #{tpu_custom_call.1} parent=0
    _
  %s5 = ssub.s32 1, %s3
  %s6 = scalar_select 0, %s5, %s3
  $region1: #{tpu_custom_call.1} parent=0
    #allocation2 [shape = 'u8[4096]{0}', space=vmem, size = 0x1000, scoped, tag = 'input window, operand 0, single buffered']
    #allocation3 [shape = 's32[1]{0}', space=sflag, size = 0x4, scoped, tag = 'scoped memory for tpu_custom_call.1']
    #allocation4 [shape = 'u8[4096]{0}', space=vmem, size = 0x1000, scoped, tag = 'input window, operand 1, single buffered']
    #allocation5 [shape = 's32[1]{0}', space=sflag, size = 0x4, scoped, tag = 'scoped memory for tpu_custom_call.1']
    %7 = vsyncpa [#allocation3], 0
    %8 = vsyncpa [#allocation5], 0
    // Predicated region
    $region2: #{tpu_custom_call.1} parent=1 // pred_check
      _
    $region3: #{tpu_custom_call.1} parent=1 // pred_check_branch
      %10 = sbr.rel (0) target = $region5
    $region4: #{tpu_custom_call.1} parent=1 // pred_region
      %s12 = ssub.s32 128, 128
      %13 = vsyncadd [#allocation3], %s12
      %s15 = sshll.u32 [#allocation2], 4
      %s16 = int_to_ptr.vmem [resolvable:$true] %s15
      %18 = dma.hbm_to_vmem [thread:$0]  %s0, 128, %s16, [#allocation3]
    $region5: #{tpu_custom_call.1} parent=1 // pred_fallthru
      _
    // Predicated region
    $region6: #{tpu_custom_call.1} parent=1 // pred_check
      _
    $region7: #{tpu_custom_call.1} parent=1 // pred_check_branch
      %20 = sbr.rel (0) target = $region9
    $region8: #{tpu_custom_call.1} parent=1 // pred_region
      %s22 = ssub.s32 128, 128
      %23 = vsyncadd [#allocation5], %s22
      %s25 = sshll.u32 [#allocation4], 4
      %s26 = int_to_ptr.vmem [resolvable:$true] %s25
      %28 = dma.hbm_to_vmem [thread:$0]  %s1, 128, %s26, [#allocation5]
    $region9: #{tpu_custom_call.1} parent=1 // pred_fallthru
      _
    // Predicated region
    $region10: #{tpu_custom_call.1} parent=1 // pred_check
      _
    $region11: #{tpu_custom_call.1} parent=1 // pred_check_branch
      %30 = sbr.rel (0) target = $region13
    $region12: #{tpu_custom_call.1} parent=1 // pred_region
      %31 = dma.done [#allocation3], 128
    $region13: #{tpu_custom_call.1} parent=1 // pred_fallthru
      _
    // Predicated region
    $region14: #{tpu_custom_call.1} parent=1 // pred_check
      _
    $region15: #{tpu_custom_call.1} parent=1 // pred_check_branch
      %33 = sbr.rel (0) target = $region17
    $region16: #{tpu_custom_call.1} parent=1 // pred_region
      %34 = dma.done [#allocation5], 128
    $region17: #{tpu_custom_call.1} parent=1 // pred_fallthru
      _
    %v35 = vld [vmem:[#allocation2] sm:$0xff]
    %v36 = vld [vmem:[#allocation4] sm:$0xff]
    %v37 = vmul.f32 %v36, %v36
    %38 = vadd.xlane.f32.xlu0 %v37
    %v39 = vpop.xlane.xlu0 %38
    %v40 = vrcp.pop 128.0
    %v41 = vmul.f32 %v39, %v40
    %v42 = vsub.f32 %v35, %v41
    %v43 = vmul.f32 %v42, %v42
    %44 = vadd.xlane.f32.xlu0 %v43
    %v45 = vpop.xlane.xlu0 %44
    %v46 = vmul.f32 %v45, %v40
    %v47 = vadd.f32 %v46, 1e-08
    %v48 = vrcp.pop %v47
    %v49 = vmul.f32 %v41, %v48
    %v50 = vlog2.pop %v49
    %v51 = vmul.f32 %v50, 0.6931472
    %v52 = vmul.f32 %v51, 0.4342945
    %v53 = vmul.f32 %v52, 10.0
    %vm54 = vcmask 7168
    %55 = vst.msk [vmem:[%s2] sm:$0xff] %vm54, %v53
    // Predicated region
    $region18: #{tpu_custom_call.1} parent=1 // pred_check
      _
    $region19: #{tpu_custom_call.1} parent=1 // pred_check_branch
      %57 = sbr.rel (0) target = $region21
    $region20: #{tpu_custom_call.1} parent=1 // pred_region
      _
    $region21: #{tpu_custom_call.1} parent=1 // pred_fallthru
      _
    // Predicated region
    $region22: #{tpu_custom_call.1} parent=1 // pred_check
      _
    $region23: #{tpu_custom_call.1} parent=1 // pred_check_branch
      %59 = sbr.rel (0) target = $region25
    $region24: #{tpu_custom_call.1} parent=1 // pred_region
      _
    $region25: #{tpu_custom_call.1} parent=1 // pred_fallthru
      _
    %60 = vsyncpa [#allocation3], 1
    %61 = vsyncpa [#allocation5], 1

</llo_original>
